<compile_context>
chip_gen: v7x
topology: tpu7x:2x2x1
jax: 0.10.0
libtpu: 0.0.40
codegen_flags: <defaults>
</compile_context>

<pallas_src>
import math

import jax
import jax.numpy as jnp
from jax import lax
from jax.experimental import pallas as pl
from jax.experimental.pallas import tpu as pltpu


WINDOW = 3    # config.window_size; padding=(1, 0) keeps conv output length == L
N_PIECES = 3  # piecewise pooling always uses 3 pieces


def _choose_tiles(B, L, H):
    """Pick (chunk batch c_bt, grid-step batch Bt)."""
    # ~256 rows per inner compute chunk (scaled down for wide H) keeps the f32
    # matmul-output chunk around <=128 KB -> lives in vregs, no spill churn.
    lane_tiles = -(-(N_PIECES * H) // 128)             # ceil(3H / 128)
    rows_target = max(8, 256 // lane_tiles)
    c_bt = max(1, rows_target // L)
    bt_align = c_bt * 8 // math.gcd(c_bt, 8)           # lcm(c_bt, 8): keeps the
    # output block's sublane dim 8-aligned and a whole number of chunks.
    # ~4096 rows (~1 MB bf16 im2col) per grid step amortizes the ~0.35us
    # per-step pipeline overhead (~600 cycles) -> near the HBM roofline.
    bt_big = max(bt_align, ((4096 // L) // bt_align) * bt_align)
    if B <= 2 * bt_big:
        # Small batch: cover it in ~2 grid steps so v7x's second TensorCore
        # still gets work; never go below one chunk per step.
        bt = max(bt_align, pl.cdiv(pl.cdiv(B, 2), bt_align) * bt_align)
        bt = min(bt, bt_big)
    else:
        bt = bt_big
    return c_bt, bt


def _make_kernel(L, H, c_bt, n_chunks):
    c_rows = c_bt * L            # rows handled per inner chunk
    out_w = N_PIECES * H

    def kernel(x_ref, w_ref, b_ref, out_ref):
        # x_ref  : (Bt*L, K+3) bf16   [im2col | 3 mask columns (0/100)]
        # w_ref  : (K+3, 3H)   bf16   [tile(conv_w, 3) ; kron(I3, ones(1,H))]
        # b_ref  : (1, 3H)     f32    bias tiled piece-major
        # out_ref: (Bt, 3H)    f32    relu(max_L(conv + mask_p) + bias - 100)
        w = w_ref[...]                               # (K+3, 3H) bf16
        b_m100 = b_ref[...] - 100.0                  # (1, 3H)   f32

        def chunk(c):
            r0 = c * c_rows
            b0 = c * c_bt
            if n_chunks > 1:                          # dynamic starts: hint
                r0 = pl.multiple_of(r0, c_rows)
                b0 = pl.multiple_of(b0, c_bt)
            xc = x_ref[pl.ds(r0, c_rows), :]          # (c_rows, K+3) bf16
            # Single fused MXU matmul; the 3 mask columns hit the identity
            # rows of w, so conv3[row, p*H+h] = conv[row, h] + mask[row, p].
            conv3 = jnp.dot(xc, w, preferred_element_type=jnp.float32)
            # Piecewise max over L: sublane split (cheap), reduce middle axis.
            pooled = jnp.max(conv3.reshape(c_bt, L, out_w), axis=1)  # (c_bt, 3H)
            # Bias hoisted past the max (constant over L), then -100 and ReLU.
            out_ref[pl.ds(b0, c_bt), :] = jnp.maximum(pooled + b_m100, 0.0)

        if n_chunks == 1:
            chunk(0)                                  # fully static path
        else:
            def body(c, carry):
                chunk(c)
                return carry
            lax.fori_loop(0, n_chunks, body, 0)

    return kernel


def pcnn_forward(embedding, mask, weight, bias):
    """embedding: (B, L, W) f32; mask: (B, L, 3) f32 (PCNN 0/100 piece mask);
    weight: (H, 1, 3, W) f32 (PyTorch Conv2d layout); bias: (H,) f32.
    Returns (B, 3*H) f32 matching PCNN.forward (lane order h*3 + p)."""
    B, L, W = embedding.shape
    H = weight.shape[0]
    K = WINDOW * W
    KP = K + N_PIECES                                   # + 3 packed mask columns

    c_bt, Bt = _choose_tiles(B, L, H)
    B_pad = pl.cdiv(B, Bt) * Bt
    n_chunks = Bt // c_bt
    grid = (B_pad // Bt,)

    # ---- wrapper-side layout plumbing (XLA) --------------------------------
    # Conv2d padding=(1, 0): zero-pad the sequence dim, then im2col:
    #   im2col[b, t, dk*W + w] = emb_pad[b, t + dk, w]
    emb_pad = jnp.pad(embedding, ((0, 0), (1, 1), (0, 0)))            # (B, L+2, W)
    im2col = jnp.concatenate(
        [emb_pad[:, dk:dk + L, :] for dk in range(WINDOW)], axis=-1)  # (B, L, 3W)
    # Pack the piecewise mask as 3 extra columns (0/100 are exact in bf16).
    # TODO(synk): if arbitrary-float masks must be bit-exact, ship them as a
    # separate f32 operand instead of bf16 matmul columns.
    x = jnp.concatenate([im2col, mask.astype(im2col.dtype)], axis=-1)  # (B, L, KP)
    x = jnp.pad(x, ((0, B_pad - B), (0, 0), (0, 0)))
    x = x.reshape(B_pad * L, KP).astype(jnp.bfloat16)

    # Weight slab (KP, 3H): columns p*H + h carry the same conv weights for
    # every piece; the 3 mask rows carry an identity so the matmul adds
    # mask[:, p] onto piece p's lanes.
    w_slab = jnp.transpose(weight[:, 0, :, :], (1, 2, 0)).reshape(K, H)  # (K, H)
    w3 = jnp.tile(w_slab, (1, N_PIECES))                                 # (K, 3H)
    mask_rows = jnp.kron(jnp.eye(N_PIECES, dtype=w_slab.dtype),
                         jnp.ones((1, H), dtype=w_slab.dtype))           # (3, 3H)
    w_full = jnp.concatenate([w3, mask_rows], axis=0).astype(jnp.bfloat16)

    # Bias tiled piece-major so it can be added on the reduced (Bt, 3H) tile.
    b_row = jnp.tile(bias, N_PIECES).reshape(1, N_PIECES * H).astype(jnp.float32)

    kernel = _make_kernel(L, H, c_bt, n_chunks)
    out = pl.pallas_call(
        kernel,
        out_shape=jax.ShapeDtypeStruct((B_pad, N_PIECES * H), jnp.float32),
        grid_spec=pltpu.PrefetchScalarGridSpec(
            num_scalar_prefetch=0,
            grid=grid,
            in_specs=[
                pl.BlockSpec((Bt * L, KP), lambda i: (i, 0)),
                pl.BlockSpec((KP, N_PIECES * H), lambda i: (0, 0)),
                pl.BlockSpec((1, N_PIECES * H), lambda i: (0, 0)),
            ],
            out_specs=pl.BlockSpec((Bt, N_PIECES * H), lambda i: (i, 0)),
        ),
        compiler_params=pltpu.CompilerParams(
            dimension_semantics=("parallel",)),
    )(x, w_full, b_row)

    # (B_pad, 3H) piece-major -> drop pad -> (B, H, 3) -> (B, 3H) [h*3 + p]
    out = out[:B].reshape(B, N_PIECES, H)
    return jnp.transpose(out, (0, 2, 1)).reshape(B, N_PIECES * H)


def _reference(embedding, mask, weight, bias):
    """Pure-JAX f32 reference of the PyTorch forward (sanity check)."""
    B, L, W = embedding.shape
    H = weight.shape[0]
    emb_pad = jnp.pad(embedding, ((0, 0), (1, 1), (0, 0)))
    conv = jnp.zeros((B, L, H), dtype=jnp.float32)
    for dk in range(WINDOW):
        conv = conv + jnp.einsum("blw,hw->blh", emb_pad[:, dk:dk + L, :],
                                 weight[:, 0, dk, :])
    conv = conv + bias[None, None, :]
    x = conv[:, :, :, None].transpose(0, 2, 1, 3) + mask[:, None, :, :]
    x = jnp.max(x, axis=2) - 100.0                        # (B, H, 3)
    return jax.nn.relu(x.reshape(B, H * 3))


def _make_piece_mask(key, B, L):
    """Standard PCNN mask: 100 where position l belongs to piece p, else 0."""
    k1, k2 = jax.random.split(key)
    e1 = jax.random.randint(k1, (B,), 1, L // 2)
    e2 = jax.random.randint(k2, (B,), L // 2, L - 1)
    pos = jnp.arange(L)[None, :]
    p0 = pos <= e1[:, None]
    p2 = pos > e2[:, None]
    p1 = jnp.logical_and(~p0, ~p2)
    return 100.0 * jnp.stack([p0, p1, p2], axis=-1).astype(jnp.float32)


if __name__ == "__main__":
    # Config consistent with the module: max_length L=16, word_size=24,
    # pos_size=4 -> W = 24 + 2*4 = 32, window_size=3, hidden_size H=32.
    # Two batch sizes: B=2 exercises the static single-chunk path / 1-step
    # grid; B=96 exercises the chunked fori_loop path and a 2-step grid.
    key = jax.random.PRNGKey(0)
    for B in (2, 96):
        L, word_size, pos_size, H = 16, 24, 4, 32
        W = word_size + 2 * pos_size

        key, k_emb, k_w, k_b, k_m = jax.random.split(key, 5)
        embedding = jax.random.normal(k_emb, (B, L, W), dtype=jnp.float32)
        weight = 0.1 * jax.random.normal(k_w, (H, 1, WINDOW, W),
                                         dtype=jnp.float32)
        bias = 0.1 * jax.random.normal(k_b, (H,), dtype=jnp.float32)
        mask = _make_piece_mask(k_m, B, L)

        out = jax.block_until_ready(pcnn_forward(embedding, mask, weight, bias))
        ref = _reference(embedding, mask, weight, bias)
        assert out.shape == (B, 3 * H)
        # bf16 matmul operands (f32 accumulation) vs f32 reference.
        assert jnp.allclose(out, ref, atol=3e-2, rtol=3e-2), (
            float(jnp.max(jnp.abs(out - ref))))

    print("KERNEL_OK")
</pallas_src>

<mosaic_0001>
module attributes {stable_mosaic.version = 11 : i64} {
  func.func @kernel(%arg0: i32, %arg1: memref<256x99xbf16, #tpu.memory_space<vmem>>, %arg2: memref<99x96xbf16, #tpu.memory_space<vmem>>, %arg3: memref<1x96xf32, #tpu.memory_space<vmem>>, %arg4: memref<16x96xf32, #tpu.memory_space<vmem>>) attributes {dimension_semantics = [#tpu.dimension_semantics<parallel>], iteration_bounds = array<i64: 1>, scalar_prefetch = 0 : i64, scratch_operands = 0 : i64, tpu.core_type = #tpu.core_type<tc>, window_params = [{transform_indices = @transform_0, window_bounds = array<i64: 256, 99>}, {pipeline_mode = #tpu.pipeline_mode<synchronous>, transform_indices = @transform_1, window_bounds = array<i64: 99, 96>}, {pipeline_mode = #tpu.pipeline_mode<synchronous>, transform_indices = @transform_2, window_bounds = array<i64: 1, 96>}, {transform_indices = @transform_3, window_bounds = array<i64: 16, 96>}]} {
    %c0 = arith.constant 0 : index
    %c0_0 = arith.constant 0 : index
    %0 = vector.load %arg2[%c0, %c0_0] : memref<99x96xbf16, #tpu.memory_space<vmem>>, vector<99x96xbf16>
    %c0_1 = arith.constant 0 : index
    %c0_2 = arith.constant 0 : index
    %1 = vector.load %arg3[%c0_1, %c0_2] : memref<1x96xf32, #tpu.memory_space<vmem>>, vector<1x96xf32>
    %cst = arith.constant 1.000000e+02 : f32
    %2 = vector.broadcast %cst : f32 to vector<1x96xf32>
    %3 = arith.subf %1, %2 : vector<1x96xf32>
    %c0_3 = arith.constant 0 : index
    %c0_4 = arith.constant 0 : index
    %4 = vector.load %arg1[%c0_3, %c0_4] : memref<256x99xbf16, #tpu.memory_space<vmem>>, vector<256x99xbf16>
    %cst_5 = arith.constant dense<0.000000e+00> : vector<256x96xf32>
    %5 = tpu.matmul %4, %0, %cst_5 {dimension_numbers = #tpu.dot_dimension_numbers<[1], [0], [0], [1], [0, 0, 1, 1], [], []>} : vector<256x99xbf16>, vector<99x96xbf16>, vector<256x96xf32> -> vector<256x96xf32>
    %6 = vector.shape_cast %5 : vector<256x96xf32> to vector<16x16x96xf32>
    %cst_6 = arith.constant dense<0xFF800000> : vector<16x96xf32>
    %7 = vector.multi_reduction <maximumf>, %6, %cst_6 [1] : vector<16x16x96xf32> to vector<16x96xf32>
    %8 = vector.broadcast %3 : vector<1x96xf32> to vector<16x96xf32>
    %9 = arith.addf %7, %8 : vector<16x96xf32>
    %cst_7 = arith.constant 0.000000e+00 : f32
    %10 = vector.broadcast %cst_7 : f32 to vector<16x96xf32>
    %11 = arith.maximumf %9, %10 : vector<16x96xf32>
    %c0_8 = arith.constant 0 : index
    %c0_9 = arith.constant 0 : index
    %12 = vector.load %arg4[%c0_8, %c0_9] : memref<16x96xf32, #tpu.memory_space<vmem>>, vector<16x96xf32>
    tpu.vector_store %arg4[%c0_8, %c0_9], %11 {strides = array<i32>} : memref<16x96xf32, #tpu.memory_space<vmem>>, vector<16x96xf32>,
    return
  }
  func.func @transform_0(%arg0: i32) -> (i32, i32) {
    %c0_i32 = arith.constant 0 : i32
    %c0_i32_0 = arith.constant 0 : i32
    return %arg0, %c0_i32 : i32, i32
  }
  func.func @transform_1(%arg0: i32) -> (i32, i32) {
    %c0_i32 = arith.constant 0 : i32
    %c0_i32_0 = arith.constant 0 : i32
    %c0_i32_1 = arith.constant 0 : i32
    return %c0_i32, %c0_i32_0 : i32, i32
  }
  func.func @transform_2(%arg0: i32) -> (i32, i32) {
    %c0_i32 = arith.constant 0 : i32
    %c0_i32_0 = arith.constant 0 : i32
    %c0_i32_1 = arith.constant 0 : i32
    return %c0_i32, %c0_i32_0 : i32, i32
  }
  func.func @transform_3(%arg0: i32) -> (i32, i32) {
    %c0_i32 = arith.constant 0 : i32
    %c0_i32_0 = arith.constant 0 : i32
    return %arg0, %c0_i32 : i32, i32
  }
}

</mosaic_0001>

<llo_original>
// kernel: tpu_custom_call.1
$region0: #{tpu_custom_call.1}
  #allocation0 [shape = 'u32[]', space=smem, size = 0x4, offset = 0x4, fixed_abs, tag = 'smem constant byte address 0x4 - core index']
  #allocation1 [shape = 'u32[144,128]{1,0:T(1,128)}', space=vmem, size = 0x12000, scoped, tag = 'internal scratch']
  %s0 = inlined_call_operand.vmem [shape: bf16[256,99], index: 0, kind: input, shape index: {}]
  %s1 = inlined_call_operand.vmem [shape: bf16[99,96], index: 1, kind: input, shape index: {}]
  %s2 = inlined_call_operand.vmem [shape: f32[1,96], index: 2, kind: input, shape index: {}]
  %s3 = inlined_call_operand.hbm [shape: f32[16,96], index: 3, kind: output, shape index: {}]
  %s4 = sld [smem:[#allocation0]]
  $region22: #{tpu_custom_call.1} parent=0
    _
  %s6 = ssub.s32 1, %s4
  %s7 = scalar_select 0, %s6, %s4
  $region1: #{tpu_custom_call.1} parent=0
    #allocation2 [shape = 'u8[8192]{0}', space=vmem, size = 0x2000, scoped, tag = 'output window, operand 0, single buffered']
    #allocation3 [shape = 's32[1]{0}', space=sflag, size = 0x4, scoped, tag = 'scoped memory for tpu_custom_call.1']
    %8 = vsyncpa [#allocation3], 0
    // Predicated region
    $region2: #{tpu_custom_call.1} parent=1 // pred_check
      _
    $region3: #{tpu_custom_call.1} parent=1 // pred_check_branch
      %10 = sbr.rel (0) target = $region5
    $region4: #{tpu_custom_call.1} parent=1 // pred_region
      _
    $region5: #{tpu_custom_call.1} parent=1 // pred_fallthru
      _
    // Predicated region
    $region6: #{tpu_custom_call.1} parent=1 // pred_check
      _
    $region7: #{tpu_custom_call.1} parent=1 // pred_check_branch
      %12 = sbr.rel (0) target = $region9
    $region8: #{tpu_custom_call.1} parent=1 // pred_region
      _
    $region9: #{tpu_custom_call.1} parent=1 // pred_fallthru
      _
    // Predicated region
    $region10: #{tpu_custom_call.1} parent=1 // pred_check
      _
    $region11: #{tpu_custom_call.1} parent=1 // pred_check_branch
      %14 = sbr.rel (0) target = $region13
    $region12: #{tpu_custom_call.1} parent=1 // pred_region
      _
    $region13: #{tpu_custom_call.1} parent=1 // pred_fallthru
      _
    %v16 = vld [vmem:[%s1] sm:$0xf]
    %v17 = vld [vmem:[%s1 + $0x4] sm:$0xf]
    %v18 = vld [vmem:[%s1 + $0x8] sm:$0xf]
    %v19 = vld [vmem:[%s1 + $0xc] sm:$0xf]
    %v20 = vld [vmem:[%s1 + $0x10] sm:$0xf]
    %v21 = vld [vmem:[%s1 + $0x14] sm:$0xf]
    %v22 = vld [vmem:[%s1 + $0x18] sm:$0xf]
    %v23 = vld [vmem:[%s1 + $0x1c] sm:$0xf]
    %v24 = vld [vmem:[%s1 + $0x20] sm:$0xf]
    %v25 = vld [vmem:[%s1 + $0x24] sm:$0xf]
    %v26 = vld [vmem:[%s1 + $0x28] sm:$0xf]
    %v27 = vld [vmem:[%s1 + $0x2c] sm:$0xf]
    %v28 = vld [vmem:[%s1 + $0x30] sm:$0x3]
    %v29 = vld [vmem:[%s2] sm:$0x1]
    %v30 = vsub.f32 %v29, 100.0
    %v31 = vld [vmem:[%s0] sm:$0xf]
    %v32 = vld [vmem:[%s0 + $0x4] sm:$0xf]
    %v33 = vld [vmem:[%s0 + $0x8] sm:$0xf]
    %v34 = vld [vmem:[%s0 + $0xc] sm:$0xf]
    %v35 = vld [vmem:[%s0 + $0x10] sm:$0xf]
    %v36 = vld [vmem:[%s0 + $0x14] sm:$0xf]
    %v37 = vld [vmem:[%s0 + $0x18] sm:$0xf]
    %v38 = vld [vmem:[%s0 + $0x1c] sm:$0xf]
    %v39 = vld [vmem:[%s0 + $0x20] sm:$0xf]
    %v40 = vld [vmem:[%s0 + $0x24] sm:$0xf]
    %v41 = vld [vmem:[%s0 + $0x28] sm:$0xf]
    %v42 = vld [vmem:[%s0 + $0x2c] sm:$0xf]
    %v43 = vld [vmem:[%s0 + $0x30] sm:$0xf]
    %v44 = vld [vmem:[%s0 + $0x34] sm:$0xf]
    %v45 = vld [vmem:[%s0 + $0x38] sm:$0xf]
    %v46 = vld [vmem:[%s0 + $0x3c] sm:$0xf]
    %v47 = vld [vmem:[%s0 + $0x40] sm:$0xf]
    %v48 = vld [vmem:[%s0 + $0x44] sm:$0xf]
    %v49 = vld [vmem:[%s0 + $0x48] sm:$0xf]
    %v50 = vld [vmem:[%s0 + $0x4c] sm:$0xf]
    %v51 = vld [vmem:[%s0 + $0x50] sm:$0xf]
    %v52 = vld [vmem:[%s0 + $0x54] sm:$0xf]
    %v53 = vld [vmem:[%s0 + $0x58] sm:$0xf]
    %v54 = vld [vmem:[%s0 + $0x5c] sm:$0xf]
    %v55 = vld [vmem:[%s0 + $0x60] sm:$0xf]
    %v56 = vld [vmem:[%s0 + $0x64] sm:$0xf]
    %v57 = vld [vmem:[%s0 + $0x68] sm:$0xf]
    %v58 = vld [vmem:[%s0 + $0x6c] sm:$0xf]
    %v59 = vld [vmem:[%s0 + $0x70] sm:$0xf]
    %v60 = vld [vmem:[%s0 + $0x74] sm:$0xf]
    %v61 = vld [vmem:[%s0 + $0x78] sm:$0xf]
    %v62 = vld [vmem:[%s0 + $0x7c] sm:$0xf]
    %v95 = vunpack.c.l.b16 %v31
    %v96 = vunpack.c.l.b16 %v32
    %v97 = vunpack.c.l.b16 %v33
    %v98 = vunpack.c.l.b16 %v34
    %v99 = vunpack.c.l.b16 %v35
    %v100 = vunpack.c.l.b16 %v36
    %v101 = vunpack.c.l.b16 %v37
    %v102 = vunpack.c.l.b16 %v38
    %v103 = vunpack.c.l.b16 %v39
    %v104 = vunpack.c.l.b16 %v40
    %v105 = vunpack.c.l.b16 %v41
    %v106 = vunpack.c.l.b16 %v42
    %v107 = vunpack.c.l.b16 %v43
    %v108 = vunpack.c.l.b16 %v44
    %v109 = vunpack.c.l.b16 %v45
    %v110 = vunpack.c.l.b16 %v46
    %v111 = vunpack.c.l.b16 %v47
    %v112 = vunpack.c.l.b16 %v48
    %v113 = vunpack.c.l.b16 %v49
    %v114 = vunpack.c.l.b16 %v50
    %v115 = vunpack.c.l.b16 %v51
    %v116 = vunpack.c.l.b16 %v52
    %v117 = vunpack.c.l.b16 %v53
    %v118 = vunpack.c.l.b16 %v54
    %v119 = vunpack.c.l.b16 %v55
    %v120 = vunpack.c.l.b16 %v56
    %v121 = vunpack.c.l.b16 %v57
    %v122 = vunpack.c.l.b16 %v58
    %v123 = vunpack.c.l.b16 %v59
    %v124 = vunpack.c.l.b16 %v60
    %v125 = vunpack.c.l.b16 %v61
    %v126 = vunpack.c.l.b16 %v62
    %v127 = vpack.c.b16 %v96, %v95
    %v128 = vpack.c.b16 %v98, %v97
    %v129 = vpack.c.b16 %v100, %v99
    %v130 = vpack.c.b16 %v102, %v101
    %v131 = vpack.c.b16 %v104, %v103
    %v132 = vpack.c.b16 %v106, %v105
    %v133 = vpack.c.b16 %v108, %v107
    %v134 = vpack.c.b16 %v110, %v109
    %v135 = vpack.c.b16 %v112, %v111
    %v136 = vpack.c.b16 %v114, %v113
    %v137 = vpack.c.b16 %v116, %v115
    %v138 = vpack.c.b16 %v118, %v117
    %v139 = vpack.c.b16 %v120, %v119
    %v140 = vpack.c.b16 %v122, %v121
    %v141 = vpack.c.b16 %v124, %v123
    %v142 = vpack.c.b16 %v126, %v125
    %v156 = vunpack.c.l.b16 %v16
    %v157 = vunpack.c.l.b16 %v17
    %v158 = vunpack.c.l.b16 %v18
    %v159 = vunpack.c.l.b16 %v19
    %v160 = vunpack.c.l.b16 %v20
    %v161 = vunpack.c.l.b16 %v21
    %v162 = vunpack.c.l.b16 %v22
    %v163 = vunpack.c.l.b16 %v23
    %v164 = vunpack.c.l.b16 %v24
    %v165 = vunpack.c.l.b16 %v25
    %v166 = vunpack.c.l.b16 %v26
    %v167 = vunpack.c.l.b16 %v27
    %v168 = vunpack.c.l.b16 %v28
    %v169 = vpack.c.b16 %v157, %v156
    %v170 = vpack.c.b16 %v159, %v158
    %v171 = vpack.c.b16 %v161, %v160
    %v172 = vpack.c.b16 %v163, %v162
    %v173 = vpack.c.b16 %v165, %v164
    %v174 = vpack.c.b16 %v167, %v166
    %v175 = vpack.c.b16 %v168, %v168
    %vm182 = vcmask 809984
    %v184 = vsel %vm182, %v127, 0
    %v187 = vsel %vm182, %v128, 0
    %v190 = vsel %vm182, %v129, 0
    %v193 = vsel %vm182, %v130, 0
    %v196 = vsel %vm182, %v131, 0
    %v199 = vsel %vm182, %v132, 0
    %v202 = vsel %vm182, %v133, 0
    %v205 = vsel %vm182, %v134, 0
    %v208 = vsel %vm182, %v135, 0
    %v211 = vsel %vm182, %v136, 0
    %v214 = vsel %vm182, %v137, 0
    %v217 = vsel %vm182, %v138, 0
    %v220 = vsel %vm182, %v139, 0
    %v223 = vsel %vm182, %v140, 0
    %v226 = vsel %vm182, %v141, 0
    %v229 = vsel %vm182, %v142, 0
    %vm231 = vcmask 1040384
    %vm232 = vcmask 1041408
    %v233 = vsel %vm231, 4294967295, 65535
    %v234 = vsel %vm232, %v233, 0
    %v236 = vand.u32 %v175, %v234
    %238 = vmatprep.subr.bf16.mxu0 0
    %239 = vmatpush1.bf16.msra.mxu0 %v169
    %240 = vmatprep.subr.bf16.mxu0 0
    %241 = vmatpush1.bf16.msra.mxu0 %v170
    %242 = vmatprep.subr.bf16.mxu0 0
    %243 = vmatpush1.bf16.msra.mxu0 %v171
    %244 = vmatprep.subr.bf16.mxu0 0
    %245 = vmatpush1.bf16.msra.mxu0 %v172
    %246 = vmatprep.subr.bf16.mxu0 0
    %247 = vmatpush1.bf16.msra.mxu0 %v173
    %248 = vmatprep.subr.bf16.mxu0 0
    %249 = vmatpush1.bf16.msra.mxu0 %v174
    %250 = vmatprep.subr.bf16.mxu0 0
    %251 = vmatpush1.bf16.msra.mxu0 %v236
    %252 = vmatprep.subr.bf16.mxu0 0
    %253 = vmatpush1.bf16.msra.mxu0 0
    %254 = vmatprep.subr.bf16.mxu0 0
    %255 = vmatpush1.bf16.msra.mxu0 0
    %256 = vmatprep.subr.bf16.mxu0 0
    %257 = vmatpush1.bf16.msra.mxu0 0
    %258 = vmatprep.subr.bf16.mxu0 0
    %259 = vmatpush1.bf16.msra.mxu0 0
    %260 = vmatprep.subr.bf16.mxu0 0
    %261 = vmatpush1.bf16.msra.mxu0 0
    %262 = vmatprep.subr.bf16.mxu0 0
    %263 = vmatpush1.bf16.msra.mxu0 0
    %264 = vmatprep.subr.bf16.mxu0 0
    %265 = vmatpush1.bf16.msra.mxu0 0
    %266 = vmatprep.subr.bf16.mxu0 0
    %267 = vmatpush1.bf16.msra.mxu0 0
    %268 = vmatprep.subr.bf16.mxu0 0
    %269 = vmatpush1.bf16.msra.mxu0 0
    %270 = vmatprep.mubr.bf16.mxu0 0
    %271 = vmatmul.mubr.bf16.gmra.mrb[0].mxu0 %v184
    %v272 = vpop.f32.mrb[0].mxu0
    %v273 = vadd.f32 0.0, %v272
    %v274 = vpop.f32.mrb[0].mxu0
    %v275 = vpop.f32.mrb[0].mxu0
    %v276 = vadd.f32 0.0, %v275
    %v277 = vpop.f32.mrb[0].mxu0
    %278 = vmatprep.mubr.bf16.mxu0 0
    %279 = vmatmul.mubr.bf16.gmra.mrb[0].mxu0 %v187
    %v280 = vpop.f32.mrb[0].mxu0
    %v281 = vadd.f32 0.0, %v280
    %v282 = vpop.f32.mrb[0].mxu0
    %v283 = vpop.f32.mrb[0].mxu0
    %v284 = vadd.f32 0.0, %v283
    %v285 = vpop.f32.mrb[0].mxu0
    %286 = vmatprep.mubr.bf16.mxu0 0
    %287 = vmatmul.mubr.bf16.gmra.mrb[0].mxu0 %v190
    %v288 = vpop.f32.mrb[0].mxu0
    %v289 = vadd.f32 0.0, %v288
    %v290 = vpop.f32.mrb[0].mxu0
    %v291 = vpop.f32.mrb[0].mxu0
    %v292 = vadd.f32 0.0, %v291
    %v293 = vpop.f32.mrb[0].mxu0
    %294 = vmatprep.mubr.bf16.mxu0 0
    %295 = vmatmul.mubr.bf16.gmra.mrb[0].mxu0 %v193
    %v296 = vpop.f32.mrb[0].mxu0
    %v297 = vadd.f32 0.0, %v296
    %v298 = vpop.f32.mrb[0].mxu0
    %v299 = vpop.f32.mrb[0].mxu0
    %v300 = vadd.f32 0.0, %v299
    %v301 = vpop.f32.mrb[0].mxu0
    %302 = vmatprep.mubr.bf16.mxu0 0
    %303 = vmatmul.mubr.bf16.gmra.mrb[0].mxu0 %v196
    %v304 = vpop.f32.mrb[0].mxu0
    %v305 = vadd.f32 0.0, %v304
    %v306 = vpop.f32.mrb[0].mxu0
    %v307 = vpop.f32.mrb[0].mxu0
    %v308 = vadd.f32 0.0, %v307
    %v309 = vpop.f32.mrb[0].mxu0
    %310 = vmatprep.mubr.bf16.mxu0 0
    %311 = vmatmul.mubr.bf16.gmra.mrb[0].mxu0 %v199
    %v312 = vpop.f32.mrb[0].mxu0
    %v313 = vadd.f32 0.0, %v312
    %v314 = vpop.f32.mrb[0].mxu0
    %v315 = vpop.f32.mrb[0].mxu0
    %v316 = vadd.f32 0.0, %v315
    %v317 = vpop.f32.mrb[0].mxu0
    %318 = vmatprep.mubr.bf16.mxu0 0
    %319 = vmatmul.mubr.bf16.gmra.mrb[0].mxu0 %v202
    %v320 = vpop.f32.mrb[0].mxu0
    %v321 = vadd.f32 0.0, %v320
    %v322 = vpop.f32.mrb[0].mxu0
    %v323 = vpop.f32.mrb[0].mxu0
    %v324 = vadd.f32 0.0, %v323
    %v325 = vpop.f32.mrb[0].mxu0
    %326 = vmatprep.mubr.bf16.mxu0 0
    %327 = vmatmul.mubr.bf16.gmra.mrb[0].mxu0 %v205
    %v328 = vpop.f32.mrb[0].mxu0
    %v329 = vadd.f32 0.0, %v328
    %v330 = vpop.f32.mrb[0].mxu0
    %v331 = vpop.f32.mrb[0].mxu0
    %v332 = vadd.f32 0.0, %v331
    %v333 = vpop.f32.mrb[0].mxu0
    %334 = vmatprep.mubr.bf16.mxu0 0
    %335 = vmatmul.mubr.bf16.gmra.mrb[0].mxu0 %v208
    %v336 = vpop.f32.mrb[0].mxu0
    %v337 = vadd.f32 0.0, %v336
    %v338 = vpop.f32.mrb[0].mxu0
    %v339 = vpop.f32.mrb[0].mxu0
    %v340 = vadd.f32 0.0, %v339
    %v341 = vpop.f32.mrb[0].mxu0
    %342 = vmatprep.mubr.bf16.mxu0 0
    %343 = vmatmul.mubr.bf16.gmra.mrb[0].mxu0 %v211
    %v344 = vpop.f32.mrb[0].mxu0
    %v345 = vadd.f32 0.0, %v344
    %v346 = vpop.f32.mrb[0].mxu0
    %v347 = vpop.f32.mrb[0].mxu0
    %v348 = vadd.f32 0.0, %v347
    %v349 = vpop.f32.mrb[0].mxu0
    %350 = vmatprep.mubr.bf16.mxu0 0
    %351 = vmatmul.mubr.bf16.gmra.mrb[0].mxu0 %v214
    %v352 = vpop.f32.mrb[0].mxu0
    %v353 = vadd.f32 0.0, %v352
    %v354 = vpop.f32.mrb[0].mxu0
    %v355 = vpop.f32.mrb[0].mxu0
    %v356 = vadd.f32 0.0, %v355
    %v357 = vpop.f32.mrb[0].mxu0
    %358 = vmatprep.mubr.bf16.mxu0 0
    %359 = vmatmul.mubr.bf16.gmra.mrb[0].mxu0 %v217
    %v360 = vpop.f32.mrb[0].mxu0
    %v361 = vadd.f32 0.0, %v360
    %v362 = vpop.f32.mrb[0].mxu0
    %v363 = vpop.f32.mrb[0].mxu0
    %v364 = vadd.f32 0.0, %v363
    %v365 = vpop.f32.mrb[0].mxu0
    %366 = vmatprep.mubr.bf16.mxu0 0
    %367 = vmatmul.mubr.bf16.gmra.mrb[0].mxu0 %v220
    %v368 = vpop.f32.mrb[0].mxu0
    %v369 = vadd.f32 0.0, %v368
    %v370 = vpop.f32.mrb[0].mxu0
    %v371 = vpop.f32.mrb[0].mxu0
    %v372 = vadd.f32 0.0, %v371
    %v373 = vpop.f32.mrb[0].mxu0
    %374 = vmatprep.mubr.bf16.mxu0 0
    %375 = vmatmul.mubr.bf16.gmra.mrb[0].mxu0 %v223
    %v376 = vpop.f32.mrb[0].mxu0
    %v377 = vadd.f32 0.0, %v376
    %v378 = vpop.f32.mrb[0].mxu0
    %v379 = vpop.f32.mrb[0].mxu0
    %v380 = vadd.f32 0.0, %v379
    %v381 = vpop.f32.mrb[0].mxu0
    %382 = vmatprep.mubr.bf16.mxu0 0
    %383 = vmatmul.mubr.bf16.gmra.mrb[0].mxu0 %v226
    %v384 = vpop.f32.mrb[0].mxu0
    %v385 = vadd.f32 0.0, %v384
    %v386 = vpop.f32.mrb[0].mxu0
    %v387 = vpop.f32.mrb[0].mxu0
    %v388 = vadd.f32 0.0, %v387
    %v389 = vpop.f32.mrb[0].mxu0
    %390 = vmatprep.mubr.bf16.mxu0 0
    %391 = vmatmul.mubr.bf16.gmra.mrb[0].mxu0 %v229
    %v392 = vpop.f32.mrb[0].mxu0
    %v393 = vadd.f32 0.0, %v392
    %v394 = vpop.f32.mrb[0].mxu0
    %v395 = vpop.f32.mrb[0].mxu0
    %v396 = vadd.f32 0.0, %v395
    %v397 = vpop.f32.mrb[0].mxu0
    %398 = vdwg.mxu0
    %vm399 = vcmask 785408
    %v400 = vsel %vm399, %v273, -inf
    %v401 = vsel %vm399, %v276, -inf
    %v402 = vmax.f32 %v400, %v401
    %v403 = vrot.slane %v402, 4
    %v404 = vmax.f32 %v402, %v403
    %v405 = vrot.slane %v404, 2
    %v406 = vmax.f32 %v404, %v405
    %v407 = vrot.slane %v406, 1
    %v408 = vmax.f32 %v406, %v407
    %v409 = vsel %vm399, %v281, -inf
    %v410 = vsel %vm399, %v284, -inf
    %v411 = vmax.f32 %v409, %v410
    %v412 = vrot.slane %v411, 4
    %v413 = vmax.f32 %v411, %v412
    %v414 = vrot.slane %v413, 2
    %v415 = vmax.f32 %v413, %v414
    %v416 = vrot.slane %v415, 1
    %v417 = vmax.f32 %v415, %v416
    %v418 = vsel %vm399, %v289, -inf
    %v419 = vsel %vm399, %v292, -inf
    %v420 = vmax.f32 %v418, %v419
    %v421 = vrot.slane %v420, 4
    %v422 = vmax.f32 %v420, %v421
    %v423 = vrot.slane %v422, 2
    %v424 = vmax.f32 %v422, %v423
    %v425 = vrot.slane %v424, 1
    %v426 = vmax.f32 %v424, %v425
    %v427 = vsel %vm399, %v297, -inf
    %v428 = vsel %vm399, %v300, -inf
    %v429 = vmax.f32 %v427, %v428
    %v430 = vrot.slane %v429, 4
    %v431 = vmax.f32 %v429, %v430
    %v432 = vrot.slane %v431, 2
    %v433 = vmax.f32 %v431, %v432
    %v434 = vrot.slane %v433, 1
    %v435 = vmax.f32 %v433, %v434
    %v436 = vsel %vm399, %v305, -inf
    %v437 = vsel %vm399, %v308, -inf
    %v438 = vmax.f32 %v436, %v437
    %v439 = vrot.slane %v438, 4
    %v440 = vmax.f32 %v438, %v439
    %v441 = vrot.slane %v440, 2
    %v442 = vmax.f32 %v440, %v441
    %v443 = vrot.slane %v442, 1
    %v444 = vmax.f32 %v442, %v443
    %v445 = vsel %vm399, %v313, -inf
    %v446 = vsel %vm399, %v316, -inf
    %v447 = vmax.f32 %v445, %v446
    %v448 = vrot.slane %v447, 4
    %v449 = vmax.f32 %v447, %v448
    %v450 = vrot.slane %v449, 2
    %v451 = vmax.f32 %v449, %v450
    %v452 = vrot.slane %v451, 1
    %v453 = vmax.f32 %v451, %v452
    %v454 = vsel %vm399, %v321, -inf
    %v455 = vsel %vm399, %v324, -inf
    %v456 = vmax.f32 %v454, %v455
    %v457 = vrot.slane %v456, 4
    %v458 = vmax.f32 %v456, %v457
    %v459 = vrot.slane %v458, 2
    %v460 = vmax.f32 %v458, %v459
    %v461 = vrot.slane %v460, 1
    %v462 = vmax.f32 %v460, %v461
    %v463 = vsel %vm399, %v329, -inf
    %v464 = vsel %vm399, %v332, -inf
    %v465 = vmax.f32 %v463, %v464
    %v466 = vrot.slane %v465, 4
    %v467 = vmax.f32 %v465, %v466
    %v468 = vrot.slane %v467, 2
    %v469 = vmax.f32 %v467, %v468
    %v470 = vrot.slane %v469, 1
    %v471 = vmax.f32 %v469, %v470
    %v472 = vsel %vm399, %v337, -inf
    %v473 = vsel %vm399, %v340, -inf
    %v474 = vmax.f32 %v472, %v473
    %v475 = vrot.slane %v474, 4
    %v476 = vmax.f32 %v474, %v475
    %v477 = vrot.slane %v476, 2
    %v478 = vmax.f32 %v476, %v477
    %v479 = vrot.slane %v478, 1
    %v480 = vmax.f32 %v478, %v479
    %v481 = vsel %vm399, %v345, -inf
    %v482 = vsel %vm399, %v348, -inf
    %v483 = vmax.f32 %v481, %v482
    %v484 = vrot.slane %v483, 4
    %v485 = vmax.f32 %v483, %v484
    %v486 = vrot.slane %v485, 2
    %v487 = vmax.f32 %v485, %v486
    %v488 = vrot.slane %v487, 1
    %v489 = vmax.f32 %v487, %v488
    %v490 = vsel %vm399, %v353, -inf
    %v491 = vsel %vm399, %v356, -inf
    %v492 = vmax.f32 %v490, %v491
    %v493 = vrot.slane %v492, 4
    %v494 = vmax.f32 %v492, %v493
    %v495 = vrot.slane %v494, 2
    %v496 = vmax.f32 %v494, %v495
    %v497 = vrot.slane %v496, 1
    %v498 = vmax.f32 %v496, %v497
    %v499 = vsel %vm399, %v361, -inf
    %v500 = vsel %vm399, %v364, -inf
    %v501 = vmax.f32 %v499, %v500
    %v502 = vrot.slane %v501, 4
    %v503 = vmax.f32 %v501, %v502
    %v504 = vrot.slane %v503, 2
    %v505 = vmax.f32 %v503, %v504
    %v506 = vrot.slane %v505, 1
    %v507 = vmax.f32 %v505, %v506
    %v508 = vsel %vm399, %v369, -inf
    %v509 = vsel %vm399, %v372, -inf
    %v510 = vmax.f32 %v508, %v509
    %v511 = vrot.slane %v510, 4
    %v512 = vmax.f32 %v510, %v511
    %v513 = vrot.slane %v512, 2
    %v514 = vmax.f32 %v512, %v513
    %v515 = vrot.slane %v514, 1
    %v516 = vmax.f32 %v514, %v515
    %v517 = vsel %vm399, %v377, -inf
    %v518 = vsel %vm399, %v380, -inf
    %v519 = vmax.f32 %v517, %v518
    %v520 = vrot.slane %v519, 4
    %v521 = vmax.f32 %v519, %v520
    %v522 = vrot.slane %v521, 2
    %v523 = vmax.f32 %v521, %v522
    %v524 = vrot.slane %v523, 1
    %v525 = vmax.f32 %v523, %v524
    %v526 = vsel %vm399, %v385, -inf
    %v527 = vsel %vm399, %v388, -inf
    %v528 = vmax.f32 %v526, %v527
    %v529 = vrot.slane %v528, 4
    %v530 = vmax.f32 %v528, %v529
    %v531 = vrot.slane %v530, 2
    %v532 = vmax.f32 %v530, %v531
    %v533 = vrot.slane %v532, 1
    %v534 = vmax.f32 %v532, %v533
    %v535 = vsel %vm399, %v393, -inf
    %v536 = vsel %vm399, %v396, -inf
    %v537 = vmax.f32 %v535, %v536
    %v538 = vrot.slane %v537, 4
    %v539 = vmax.f32 %v537, %v538
    %v540 = vrot.slane %v539, 2
    %v541 = vmax.f32 %v539, %v540
    %v542 = vrot.slane %v541, 1
    %v543 = vmax.f32 %v541, %v542
    %v545 = vlaneseq
    %v546 = vshrl.u32 %v545, 7
    %v547 = vsub.s32 0, %v546
    %v548 = vrot.slane %v30, %v547
    %v550 = vadd.f32 %v408, %v548
    %v551 = vadd.f32 %v417, %v548
    %v552 = vadd.f32 %v426, %v548
    %v553 = vadd.f32 %v435, %v548
    %v554 = vadd.f32 %v444, %v548
    %v555 = vadd.f32 %v453, %v548
    %v556 = vadd.f32 %v462, %v548
    %v557 = vadd.f32 %v471, %v548
    %v558 = vadd.f32 %v480, %v548
    %v559 = vadd.f32 %v489, %v548
    %v560 = vadd.f32 %v498, %v548
    %v561 = vadd.f32 %v507, %v548
    %v562 = vadd.f32 %v516, %v548
    %v563 = vadd.f32 %v525, %v548
    %v564 = vadd.f32 %v534, %v548
    %v565 = vadd.f32 %v543, %v548
    %v566 = vmax.f32 %v550, 0.0
    %v567 = vmax.f32 %v551, 0.0
    %v568 = vmax.f32 %v552, 0.0
    %v569 = vmax.f32 %v553, 0.0
    %v570 = vmax.f32 %v554, 0.0
    %v571 = vmax.f32 %v555, 0.0
    %v572 = vmax.f32 %v556, 0.0
    %v573 = vmax.f32 %v557, 0.0
    %v574 = vmax.f32 %v558, 0.0
    %v575 = vmax.f32 %v559, 0.0
    %v576 = vmax.f32 %v560, 0.0
    %v577 = vmax.f32 %v561, 0.0
    %v578 = vmax.f32 %v562, 0.0
    %v579 = vmax.f32 %v563, 0.0
    %v580 = vmax.f32 %v564, 0.0
    %v581 = vmax.f32 %v565, 0.0
    %v598 = vrot.slane %v567, 7
    %vm599 = vcmask 1041409
    %v600 = vsel %vm599, %v598, %v566
    %v601 = vrot.slane %v568, 6
    %vm602 = vcmask 1042434
    %v603 = vsel %vm602, %v601, %v600
    %v604 = vrot.slane %v569, 5
    %vm605 = vcmask 1043459
    %v606 = vsel %vm605, %v604, %v603
    %v607 = vrot.slane %v570, 4
    %vm608 = vcmask 1044484
    %v609 = vsel %vm608, %v607, %v606
    %v610 = vrot.slane %v571, 3
    %vm611 = vcmask 1045509
    %v612 = vsel %vm611, %v610, %v609
    %v613 = vrot.slane %v572, 2
    %vm614 = vcmask 1046534
    %v615 = vsel %vm614, %v613, %v612
    %v616 = vrot.slane %v573, 1
    %vm617 = vcmask 1047559
    %v618 = vsel %vm617, %v616, %v615
    %v619 = vrot.slane %v575, 7
    %v620 = vsel %vm599, %v619, %v574
    %v621 = vrot.slane %v576, 6
    %v622 = vsel %vm602, %v621, %v620
    %v623 = vrot.slane %v577, 5
    %v624 = vsel %vm605, %v623, %v622
    %v625 = vrot.slane %v578, 4
    %v626 = vsel %vm608, %v625, %v624
    %v627 = vrot.slane %v579, 3
    %v628 = vsel %vm611, %v627, %v626
    %v629 = vrot.slane %v580, 2
    %v630 = vsel %vm614, %v629, %v628
    %v631 = vrot.slane %v581, 1
    %v632 = vsel %vm617, %v631, %v630
    %635 = vst.msk [vmem:[#allocation2] sm:$0xff] %vm399, %v618
    %636 = vst.msk [vmem:[#allocation2 + $0x8] sm:$0xff] %vm399, %v632
    // Predicated region
    $region14: #{tpu_custom_call.1} parent=1 // pred_check
      _
    $region15: #{tpu_custom_call.1} parent=1 // pred_check_branch
      %638 = sbr.rel (0) target = $region17
    $region16: #{tpu_custom_call.1} parent=1 // pred_region
      %s640 = ssub.s32 256, 256
      %641 = vsyncadd [#allocation3], %s640
      %s642 = sshll.u32 [#allocation2], 4
      %s643 = int_to_ptr.vmem [resolvable:$true] %s642
      %648 = dma.vmem_to_hbm [thread:$0]  %s643, 256, %s3, [#allocation3], 128, 128, 8
    $region17: #{tpu_custom_call.1} parent=1 // pred_fallthru
      _
    // Predicated region
    $region18: #{tpu_custom_call.1} parent=1 // pred_check
      _
    $region19: #{tpu_custom_call.1} parent=1 // pred_check_branch
      %650 = sbr.rel (0) target = $region21
    $region20: #{tpu_custom_call.1} parent=1 // pred_region
      %651 = dma.done [#allocation3], 256
    $region21: #{tpu_custom_call.1} parent=1 // pred_fallthru
      _
    %652 = vsyncpa [#allocation3], 1

</llo_original>
